<compile_context>
chip_gen: v7x
topology: tpu7x:2x2x1
jax: 0.10.0
libtpu: 0.0.40
codegen_flags: <defaults>
</compile_context>

<pallas_src>
import functools

import jax
import jax.numpy as jnp
from jax.experimental import pallas as pl
from jax.experimental.pallas import tpu as pltpu

_LANES = 128


def _round_up(x: int, m: int) -> int:
    return ((x + m - 1) // m) * m


def _critic_kernel(x_ref, w1_ref, b1_ref, w2_ref, b2_ref, w3_ref, b3_ref, o_ref):
    """One batch tile of the fused 3-layer MLP: bf16 MXU matmuls + f32 accumulate + VPU ReLU."""
    x = x_ref[...]  # (TM, S) bf16 — already cast in the wrapper, no redundant astype here.

    h1 = jnp.dot(x, w1_ref[...], preferred_element_type=jnp.float32) + b1_ref[...]
    h1 = jnp.maximum(h1, 0.0).astype(jnp.bfloat16)

    h2 = jnp.dot(h1, w2_ref[...], preferred_element_type=jnp.float32) + b2_ref[...]
    h2 = jnp.maximum(h2, 0.0).astype(jnp.bfloat16)

    # Final layer is lane-dense: w3/b3 are padded to 128 output lanes (only lane 0 is real).
    v = jnp.dot(h2, w3_ref[...], preferred_element_type=jnp.float32) + b3_ref[...]
    o_ref[...] = v.astype(o_ref.dtype)


def _critic_forward_pallas(state, params):
    w1, b1, w2, b2, w3, b3 = params
    B, S = state.shape
    H = w1.shape[1]

    # Batch tile: multiple of 16 sublanes (bf16 packing); 128/256 rows per tile when batched.
    if B >= 512:
        TM = 256
    elif B >= 128:
        TM = 128
    else:
        TM = _round_up(B, 16)
    Bp = _round_up(B, TM)
    grid = (Bp // TM,)

    # bf16 MXU operands; zero-pad the batch so every tile is full (stores stay unmasked).
    xp = jnp.zeros((Bp, S), jnp.bfloat16).at[:B].set(state.astype(jnp.bfloat16))
    w1b = w1.astype(jnp.bfloat16)
    w2b = w2.astype(jnp.bfloat16)
    b1f = b1.astype(jnp.float32)
    b2f = b2.astype(jnp.float32)
    # Lane-dense last layer: pad (H,1) -> (H,128), (1,1) -> (1,128) with zeros.
    w3p = jnp.zeros((H, _LANES), jnp.bfloat16).at[:, :1].set(w3.astype(jnp.bfloat16))
    b3p = jnp.zeros((1, _LANES), jnp.float32).at[:, :1].set(b3.astype(jnp.float32))

    def const(shp):  # weight/bias blocks: same block for every grid step -> VMEM-resident
        return pl.BlockSpec(shp, lambda i: (0,) * len(shp))

    flops = 2 * Bp * (S * H + H * H + H * _LANES)
    bytes_accessed = (
        xp.size * 2 + w1b.size * 2 + w2b.size * 2 + w3p.size * 2
        + b1f.size * 4 + b2f.size * 4 + b3p.size * 4 + Bp * _LANES * 4
    )

    out = pl.pallas_call(
        _critic_kernel,
        out_shape=jax.ShapeDtypeStruct((Bp, _LANES), jnp.float32),
        grid=grid,
        in_specs=[
            pl.BlockSpec((TM, S), lambda i: (i, 0)),   # state: pipelined over batch tiles
            const((S, H)), const((1, H)),              # layer 1 weights / bias
            const((H, H)), const((1, H)),              # layer 2
            const((H, _LANES)), const((1, _LANES)),    # layer 3 (lane-padded)
        ],
        out_specs=pl.BlockSpec((TM, _LANES), lambda i: (i, 0)),
        compiler_params=pltpu.CompilerParams(
            dimension_semantics=("parallel",),  # batch tiles across both TCs on v7x
        ),
        cost_estimate=pl.CostEstimate(
            flops=flops, transcendentals=0, bytes_accessed=bytes_accessed
        ),
    )(xp, w1b, b1f, w2b, b2f, w3p, b3p)

    return out[:B, :1]


def critic_reference(state, params):
    """Pure-JAX f32 reference of the PyTorch forward for verification / tiny-batch fallback."""
    if state.ndim == 1:
        state = state[None, :]
    w1, b1, w2, b2, w3, b3 = params
    h = jnp.maximum(state @ w1 + b1, 0.0)
    h = jnp.maximum(h @ w2 + b2, 0.0)
    return h @ w3 + b3


@functools.partial(jax.jit, static_argnames=("force_pallas",))
def critic_forward(state, params, force_pallas=False):
    """Matches Critic.forward: promotes 1-D state to (1, state_dim), returns (B, 1) values."""
    if state.ndim == 1:
        state = state[None, :]
    B = state.shape[0]
    # At B<16 the whole forward is a few hundred FLOPs; per-kernel overhead dominates,
    # so let fused XLA handle it unless the caller forces the Pallas path.
    if B < 16 and not force_pallas:
        return critic_reference(state, params)
    return _critic_forward_pallas(state, params)


def init_critic_params(key, state_dim, hidden_dim=256):
    """Deterministic init mimicking torch.nn.Linear defaults U(-1/sqrt(fan_in), +1/sqrt(fan_in))."""
    ks = jax.random.split(key, 6)

    def linear(kw, kb, fan_in, fan_out):
        bound = 1.0 / jnp.sqrt(jnp.asarray(fan_in, jnp.float32))
        # stored as (in, out) so the kernel computes x @ W; biases kept 2-D (1, out).
        w = jax.random.uniform(kw, (fan_in, fan_out), jnp.float32, -bound, bound)
        b = jax.random.uniform(kb, (1, fan_out), jnp.float32, -bound, bound)
        return w, b

    w1, b1 = linear(ks[0], ks[1], state_dim, hidden_dim)
    w2, b2 = linear(ks[2], ks[3], hidden_dim, hidden_dim)
    w3, b3 = linear(ks[4], ks[5], hidden_dim, 1)
    return (w1, b1, w2, b2, w3, b3)


if __name__ == "__main__":
    key = jax.random.PRNGKey(0)
    k_param, k_state = jax.random.split(key)

    state_dim = 32
    hidden_dim = 128
    batch = 256

    params = init_critic_params(k_param, state_dim, hidden_dim)
    state = jax.random.normal(k_state, (batch, state_dim), jnp.float32)

    # Batched path -> Pallas kernel (grid over batch tiles).
    value = jax.block_until_ready(critic_forward(state, params))
    ref = critic_reference(state, params)
    assert value.shape == (batch, 1), value.shape
    # Kernel feeds the MXU bf16 operands (f32 accumulation), so compare at bf16-level tolerance.
    assert jnp.allclose(value, ref, atol=5e-2, rtol=5e-2), float(jnp.max(jnp.abs(value - ref)))

    # Odd batch size exercises the pad-and-slice path through the Pallas kernel.
    v_odd = jax.block_until_ready(critic_forward(state[:37], params, force_pallas=True))
    assert v_odd.shape == (37, 1)
    assert jnp.allclose(v_odd, ref[:37], atol=5e-2, rtol=5e-2)

    # 1-D state path (state.dim() == 1 branch) — tiny batch uses the exact f32 fallback.
    v1 = jax.block_until_ready(critic_forward(state[0], params))
    assert v1.shape == (1, 1)
    assert jnp.allclose(v1, ref[:1], atol=1e-5, rtol=1e-5)

    print("KERNEL_OK")
</pallas_src>

<mosaic_0001>
module attributes {stable_mosaic.version = 11 : i64} {
  func.func @_critic_kernel(%arg0: i32, %arg1: memref<128x32xbf16, #tpu.memory_space<vmem>>, %arg2: memref<32x128xbf16, #tpu.memory_space<vmem>>, %arg3: memref<1x128xf32, #tpu.memory_space<vmem>>, %arg4: memref<128x128xbf16, #tpu.memory_space<vmem>>, %arg5: memref<1x128xf32, #tpu.memory_space<vmem>>, %arg6: memref<128x128xbf16, #tpu.memory_space<vmem>>, %arg7: memref<1x128xf32, #tpu.memory_space<vmem>>, %arg8: memref<128x128xf32, #tpu.memory_space<vmem>>) attributes {dimension_semantics = [#tpu.dimension_semantics<parallel>], iteration_bounds = array<i64: 2>, scalar_prefetch = 0 : i64, scratch_operands = 0 : i64, tpu.core_type = #tpu.core_type<tc>, window_params = [{transform_indices = @transform_0, window_bounds = array<i64: 128, 32>}, {pipeline_mode = #tpu.pipeline_mode<synchronous>, transform_indices = @transform_1, window_bounds = array<i64: 32, 128>}, {pipeline_mode = #tpu.pipeline_mode<synchronous>, transform_indices = @transform_2, window_bounds = array<i64: 1, 128>}, {pipeline_mode = #tpu.pipeline_mode<synchronous>, transform_indices = @transform_3, window_bounds = array<i64: 128, 128>}, {pipeline_mode = #tpu.pipeline_mode<synchronous>, transform_indices = @transform_4, window_bounds = array<i64: 1, 128>}, {pipeline_mode = #tpu.pipeline_mode<synchronous>, transform_indices = @transform_5, window_bounds = array<i64: 128, 128>}, {pipeline_mode = #tpu.pipeline_mode<synchronous>, transform_indices = @transform_6, window_bounds = array<i64: 1, 128>}, {transform_indices = @transform_7, window_bounds = array<i64: 128, 128>}]} {
    %c0 = arith.constant 0 : index
    %c0_0 = arith.constant 0 : index
    %0 = vector.load %arg1[%c0, %c0_0] : memref<128x32xbf16, #tpu.memory_space<vmem>>, vector<128x32xbf16>
    %c0_1 = arith.constant 0 : index
    %c0_2 = arith.constant 0 : index
    %1 = vector.load %arg2[%c0_1, %c0_2] : memref<32x128xbf16, #tpu.memory_space<vmem>>, vector<32x128xbf16>
    %cst = arith.constant dense<0.000000e+00> : vector<128x128xf32>
    %2 = tpu.matmul %0, %1, %cst {dimension_numbers = #tpu.dot_dimension_numbers<[1], [0], [0], [1], [0, 0, 1, 1], [], []>} : vector<128x32xbf16>, vector<32x128xbf16>, vector<128x128xf32> -> vector<128x128xf32>
    %c0_3 = arith.constant 0 : index
    %c0_4 = arith.constant 0 : index
    %3 = vector.load %arg3[%c0_3, %c0_4] : memref<1x128xf32, #tpu.memory_space<vmem>>, vector<1x128xf32>
    %4 = vector.broadcast %3 : vector<1x128xf32> to vector<128x128xf32>
    %5 = arith.addf %2, %4 : vector<128x128xf32>
    %cst_5 = arith.constant 0.000000e+00 : f32
    %6 = vector.broadcast %cst_5 : f32 to vector<128x128xf32>
    %7 = arith.maximumf %5, %6 : vector<128x128xf32>
    %8 = arith.truncf %7 : vector<128x128xf32> to vector<128x128xbf16>
    %c0_6 = arith.constant 0 : index
    %c0_7 = arith.constant 0 : index
    %9 = vector.load %arg4[%c0_6, %c0_7] : memref<128x128xbf16, #tpu.memory_space<vmem>>, vector<128x128xbf16>
    %cst_8 = arith.constant dense<0.000000e+00> : vector<128x128xf32>
    %10 = tpu.matmul %8, %9, %cst_8 {dimension_numbers = #tpu.dot_dimension_numbers<[1], [0], [0], [1], [0, 0, 1, 1], [], []>} : vector<128x128xbf16>, vector<128x128xbf16>, vector<128x128xf32> -> vector<128x128xf32>
    %c0_9 = arith.constant 0 : index
    %c0_10 = arith.constant 0 : index
    %11 = vector.load %arg5[%c0_9, %c0_10] : memref<1x128xf32, #tpu.memory_space<vmem>>, vector<1x128xf32>
    %12 = vector.broadcast %11 : vector<1x128xf32> to vector<128x128xf32>
    %13 = arith.addf %10, %12 : vector<128x128xf32>
    %cst_11 = arith.constant 0.000000e+00 : f32
    %14 = vector.broadcast %cst_11 : f32 to vector<128x128xf32>
    %15 = arith.maximumf %13, %14 : vector<128x128xf32>
    %16 = arith.truncf %15 : vector<128x128xf32> to vector<128x128xbf16>
    %c0_12 = arith.constant 0 : index
    %c0_13 = arith.constant 0 : index
    %17 = vector.load %arg6[%c0_12, %c0_13] : memref<128x128xbf16, #tpu.memory_space<vmem>>, vector<128x128xbf16>
    %cst_14 = arith.constant dense<0.000000e+00> : vector<128x128xf32>
    %18 = tpu.matmul %16, %17, %cst_14 {dimension_numbers = #tpu.dot_dimension_numbers<[1], [0], [0], [1], [0, 0, 1, 1], [], []>} : vector<128x128xbf16>, vector<128x128xbf16>, vector<128x128xf32> -> vector<128x128xf32>
    %c0_15 = arith.constant 0 : index
    %c0_16 = arith.constant 0 : index
    %19 = vector.load %arg7[%c0_15, %c0_16] : memref<1x128xf32, #tpu.memory_space<vmem>>, vector<1x128xf32>
    %20 = vector.broadcast %19 : vector<1x128xf32> to vector<128x128xf32>
    %21 = arith.addf %18, %20 : vector<128x128xf32>
    %c0_17 = arith.constant 0 : index
    %c0_18 = arith.constant 0 : index
    %22 = vector.load %arg8[%c0_17, %c0_18] : memref<128x128xf32, #tpu.memory_space<vmem>>, vector<128x128xf32>
    tpu.vector_store %arg8[%c0_17, %c0_18], %21 {strides = array<i32>} : memref<128x128xf32, #tpu.memory_space<vmem>>, vector<128x128xf32>,
    return
  }
  func.func @transform_0(%arg0: i32) -> (i32, i32) {
    %c0_i32 = arith.constant 0 : i32
    %c0_i32_0 = arith.constant 0 : i32
    return %arg0, %c0_i32 : i32, i32
  }
  func.func @transform_1(%arg0: i32) -> (i32, i32) {
    %c0_i32 = arith.constant 0 : i32
    %c0_i32_0 = arith.constant 0 : i32
    %c0_i32_1 = arith.constant 0 : i32
    return %c0_i32, %c0_i32_0 : i32, i32
  }
  func.func @transform_2(%arg0: i32) -> (i32, i32) {
    %c0_i32 = arith.constant 0 : i32
    %c0_i32_0 = arith.constant 0 : i32
    %c0_i32_1 = arith.constant 0 : i32
    return %c0_i32, %c0_i32_0 : i32, i32
  }
  func.func @transform_3(%arg0: i32) -> (i32, i32) {
    %c0_i32 = arith.constant 0 : i32
    %c0_i32_0 = arith.constant 0 : i32
    %c0_i32_1 = arith.constant 0 : i32
    return %c0_i32, %c0_i32_0 : i32, i32
  }
  func.func @transform_4(%arg0: i32) -> (i32, i32) {
    %c0_i32 = arith.constant 0 : i32
    %c0_i32_0 = arith.constant 0 : i32
    %c0_i32_1 = arith.constant 0 : i32
    return %c0_i32, %c0_i32_0 : i32, i32
  }
  func.func @transform_5(%arg0: i32) -> (i32, i32) {
    %c0_i32 = arith.constant 0 : i32
    %c0_i32_0 = arith.constant 0 : i32
    %c0_i32_1 = arith.constant 0 : i32
    return %c0_i32, %c0_i32_0 : i32, i32
  }
  func.func @transform_6(%arg0: i32) -> (i32, i32) {
    %c0_i32 = arith.constant 0 : i32
    %c0_i32_0 = arith.constant 0 : i32
    %c0_i32_1 = arith.constant 0 : i32
    return %c0_i32, %c0_i32_0 : i32, i32
  }
  func.func @transform_7(%arg0: i32) -> (i32, i32) {
    %c0_i32 = arith.constant 0 : i32
    %c0_i32_0 = arith.constant 0 : i32
    return %arg0, %c0_i32 : i32, i32
  }
}

</mosaic_0001>

<llo_original>
// kernel: critic_forward.1
$region0: #{critic_forward.1}
  #allocation0 [shape = 'u32[]', space=smem, size = 0x4, offset = 0x4, fixed_abs, tag = 'smem constant byte address 0x4 - core index']
  #allocation1 [shape = 'u32[144,128]{1,0:T(1,128)}', space=vmem, size = 0x12000, scoped, tag = 'internal scratch']
  %s0 = inlined_call_operand.vmem [shape: bf16[256,32], index: 0, kind: input, shape index: {}]
  %s1 = inlined_call_operand.vmem [shape: bf16[32,128], index: 1, kind: input, shape index: {}]
  %s2 = inlined_call_operand.vmem [shape: f32[1,128], index: 2, kind: input, shape index: {}]
  %s3 = inlined_call_operand.vmem [shape: bf16[128,128], index: 3, kind: input, shape index: {}]
  %s4 = inlined_call_operand.vmem [shape: f32[1,128], index: 4, kind: input, shape index: {}]
  %s5 = inlined_call_operand.vmem [shape: bf16[128,128], index: 5, kind: input, shape index: {}]
  %s6 = inlined_call_operand.vmem [shape: f32[1,128], index: 6, kind: input, shape index: {}]
  %s7 = inlined_call_operand.vmem [shape: f32[256,128], index: 7, kind: output, shape index: {}]
  %s8 = sld [smem:[#allocation0]]
  $region61: #{critic_forward.1} parent=0
    _
  %s10 = ssub.s32 1, %s8
  %s11 = scalar_select 0, %s10, %s8
  loop: start=0, step=1, limit=4
  $region2: #{critic_forward.1} parent=0 // loop_pre_header
    _
  $region3: #{critic_forward.1} parent=0 // loop_header
    %s13 = sphi 0, %s17
    %p14 = scmp.ge.s32.totalorder %s13, 4
    %s23 = sphi 0, %s25
    %s26 = sphi 0, %s23
    %s27 = sphi 0, %s26
    %s43 = sphi 0, %s27
    %s47 = sphi 0, %s47
    %s49 = sphi 0, %s47
    %s50 = sphi 0, %s49
    %s64 = sphi 0, %s50
    %s68 = sphi 0, %s68
    %s70 = sphi 0, %s68
    %s71 = sphi 0, %s70
    %s85 = sphi 0, %s71
    %s89 = sphi 0, %s89
    %s91 = sphi 0, %s89
    %s92 = sphi 0, %s91
    %s106 = sphi 0, %s92
    %s110 = sphi 0, %s110
    %s112 = sphi 0, %s110
    %s113 = sphi 0, %s112
    %s127 = sphi 0, %s113
    %s131 = sphi 0, %s131
    %s133 = sphi 0, %s131
    %s134 = sphi 0, %s133
    %s148 = sphi 0, %s134
    %s152 = sphi 0, %s152
    %s154 = sphi 0, %s152
    %s155 = sphi 0, %s154
    %s169 = sphi 0, %s155
    %s175 = sphi 0, %s177
    %s178 = sphi 0, %s175
    %s179 = sphi 0, %s178
    %s195 = sphi 0, %s179
  $region4: #{critic_forward.1} parent=0 // loop_header_branch
    %16 = sbr.rel (%p14) target = $region8
  $region5: #{critic_forward.1} parent=0 // loop_body
    %s18 = ssub.s32 %s13, 1
    %s19 = ssub.s32 %s13, 2
    %s20 = sadd.s32 %s13, 1
    %s21 = ssub.s32 %s13, %s20
    %p22 = scmp.eq.s32.totalorder %s21, 0
    %s24 = sadd.s32 %s23, 1
    %s25 = scalar_select %p22, %s23, %s24
    %p28 = pneg %p22
    %p29 = scmp.eq.s32.totalorder %s13, 1
    %p30 = por %p28, %p29
    %p31 = scmp.ne.s32.totalorder %s23, %s26
    %p32 = scmp.eq.s32.totalorder %s13, 0
    %p33 = por %p31, %p32
    %p34 = scmp.ne.s32.totalorder %s23, %s26
    %p35 = scmp.eq.s32.totalorder %s18, 1
    %p36 = por %p34, %p35
    %p37 = scmp.ne.s32.totalorder %s26, %s27
    %p38 = scmp.eq.s32.totalorder %s18, 0
    %p39 = por %p37, %p38
    %p40 = scmp.ne.s32.totalorder %s26, %s27
    %p41 = scmp.eq.s32.totalorder %s19, 1
    %p42 = por %p40, %p41
    %p44 = scmp.ne.s32.totalorder %s27, %s43
    %p45 = scmp.eq.s32.totalorder %s19, 0
    %p46 = por %p44, %p45
    %s48 = sadd.s32 %s47, 1
    %p51 = scmp.eq.s32.totalorder %s13, 1
    %p52 = scmp.ne.s32.totalorder %s47, %s49
    %p53 = scmp.eq.s32.totalorder %s13, 0
    %p54 = por %p52, %p53
    %p55 = scmp.ne.s32.totalorder %s47, %s49
    %p56 = scmp.eq.s32.totalorder %s18, 1
    %p57 = por %p55, %p56
    %p58 = scmp.ne.s32.totalorder %s49, %s50
    %p59 = scmp.eq.s32.totalorder %s18, 0
    %p60 = por %p58, %p59
    %p61 = scmp.ne.s32.totalorder %s49, %s50
    %p62 = scmp.eq.s32.totalorder %s19, 1
    %p63 = por %p61, %p62
    %p65 = scmp.ne.s32.totalorder %s50, %s64
    %p66 = scmp.eq.s32.totalorder %s19, 0
    %p67 = por %p65, %p66
    %s69 = sadd.s32 %s68, 1
    %p72 = scmp.eq.s32.totalorder %s13, 1
    %p73 = scmp.ne.s32.totalorder %s68, %s70
    %p74 = scmp.eq.s32.totalorder %s13, 0
    %p75 = por %p73, %p74
    %p76 = scmp.ne.s32.totalorder %s68, %s70
    %p77 = scmp.eq.s32.totalorder %s18, 1
    %p78 = por %p76, %p77
    %p79 = scmp.ne.s32.totalorder %s70, %s71
    %p80 = scmp.eq.s32.totalorder %s18, 0
    %p81 = por %p79, %p80
    %p82 = scmp.ne.s32.totalorder %s70, %s71
    %p83 = scmp.eq.s32.totalorder %s19, 1
    %p84 = por %p82, %p83
    %p86 = scmp.ne.s32.totalorder %s71, %s85
    %p87 = scmp.eq.s32.totalorder %s19, 0
    %p88 = por %p86, %p87
    %s90 = sadd.s32 %s89, 1
    %p93 = scmp.eq.s32.totalorder %s13, 1
    %p94 = scmp.ne.s32.totalorder %s89, %s91
    %p95 = scmp.eq.s32.totalorder %s13, 0
    %p96 = por %p94, %p95
    %p97 = scmp.ne.s32.totalorder %s89, %s91
    %p98 = scmp.eq.s32.totalorder %s18, 1
    %p99 = por %p97, %p98
    %p100 = scmp.ne.s32.totalorder %s91, %s92
    %p101 = scmp.eq.s32.totalorder %s18, 0
    %p102 = por %p100, %p101
    %p103 = scmp.ne.s32.totalorder %s91, %s92
    %p104 = scmp.eq.s32.totalorder %s19, 1
    %p105 = por %p103, %p104
    %p107 = scmp.ne.s32.totalorder %s92, %s106
    %p108 = scmp.eq.s32.totalorder %s19, 0
    %p109 = por %p107, %p108
    %s111 = sadd.s32 %s110, 1
    %p114 = scmp.eq.s32.totalorder %s13, 1
    %p115 = scmp.ne.s32.totalorder %s110, %s112
    %p116 = scmp.eq.s32.totalorder %s13, 0
    %p117 = por %p115, %p116
    %p118 = scmp.ne.s32.totalorder %s110, %s112
    %p119 = scmp.eq.s32.totalorder %s18, 1
    %p120 = por %p118, %p119
    %p121 = scmp.ne.s32.totalorder %s112, %s113
    %p122 = scmp.eq.s32.totalorder %s18, 0
    %p123 = por %p121, %p122
    %p124 = scmp.ne.s32.totalorder %s112, %s113
    %p125 = scmp.eq.s32.totalorder %s19, 1
    %p126 = por %p124, %p125
    %p128 = scmp.ne.s32.totalorder %s113, %s127
    %p129 = scmp.eq.s32.totalorder %s19, 0
    %p130 = por %p128, %p129
    %s132 = sadd.s32 %s131, 1
    %p135 = scmp.eq.s32.totalorder %s13, 1
    %p136 = scmp.ne.s32.totalorder %s131, %s133
    %p137 = scmp.eq.s32.totalorder %s13, 0
    %p138 = por %p136, %p137
    %p139 = scmp.ne.s32.totalorder %s131, %s133
    %p140 = scmp.eq.s32.totalorder %s18, 1
    %p141 = por %p139, %p140
    %p142 = scmp.ne.s32.totalorder %s133, %s134
    %p143 = scmp.eq.s32.totalorder %s18, 0
    %p144 = por %p142, %p143
    %p145 = scmp.ne.s32.totalorder %s133, %s134
    %p146 = scmp.eq.s32.totalorder %s19, 1
    %p147 = por %p145, %p146
    %p149 = scmp.ne.s32.totalorder %s134, %s148
    %p150 = scmp.eq.s32.totalorder %s19, 0
    %p151 = por %p149, %p150
    %s153 = sadd.s32 %s152, 1
    %p156 = scmp.eq.s32.totalorder %s13, 1
    %p157 = scmp.ne.s32.totalorder %s152, %s154
    %p158 = scmp.eq.s32.totalorder %s13, 0
    %p159 = por %p157, %p158
    %p160 = scmp.ne.s32.totalorder %s152, %s154
    %p161 = scmp.eq.s32.totalorder %s18, 1
    %p162 = por %p160, %p161
    %p163 = scmp.ne.s32.totalorder %s154, %s155
    %p164 = scmp.eq.s32.totalorder %s18, 0
    %p165 = por %p163, %p164
    %p166 = scmp.ne.s32.totalorder %s154, %s155
    %p167 = scmp.eq.s32.totalorder %s19, 1
    %p168 = por %p166, %p167
    %p170 = scmp.ne.s32.totalorder %s155, %s169
    %p171 = scmp.eq.s32.totalorder %s19, 0
    %p172 = por %p170, %p171
    %s173 = ssub.s32 %s13, %s20
    %p174 = scmp.eq.s32.totalorder %s173, 0
    %s176 = sadd.s32 %s175, 1
    %s177 = scalar_select %p174, %s175, %s176
    %p180 = pneg %p174
    %p181 = scmp.eq.s32.totalorder %s13, 1
    %p182 = por %p180, %p181
    %p183 = scmp.ne.s32.totalorder %s175, %s178
    %p184 = scmp.eq.s32.totalorder %s13, 0
    %p185 = por %p183, %p184
    %p186 = scmp.ne.s32.totalorder %s175, %s178
    %p187 = scmp.eq.s32.totalorder %s18, 1
    %p188 = por %p186, %p187
    %p189 = scmp.ne.s32.totalorder %s178, %s179
    %p190 = scmp.eq.s32.totalorder %s18, 0
    %p191 = por %p189, %p190
    %p192 = scmp.ne.s32.totalorder %s178, %s179
    %p193 = scmp.eq.s32.totalorder %s19, 1
    %p194 = por %p192, %p193
    %p196 = scmp.ne.s32.totalorder %s179, %s195
    %p197 = scmp.eq.s32.totalorder %s19, 0
    %p198 = por %p196, %p197
    %p199 = scmp.le.s32.totalorder 1, %s13
    %p200 = scmp.lt.s32.totalorder %s13, 3
    %p201 = pnand %p199, %p200
    %p202 = pneg %p201
    // Predicated region
    $region9: #{critic_forward.1} parent=5 // pred_check
      _
    $region10: #{critic_forward.1} parent=5 // pred_check_branch
      %204 = sbr.rel (%p201) target = $region12
    $region11: #{critic_forward.1} parent=5 // pred_region
      %s205 = ssub.s32 %s13, 1
      // Predicated region
      $region13: #{critic_forward.1} parent=11 // pred_check
        %p206 = pneg %p60
      $region14: #{critic_forward.1} parent=11 // pred_check_branch
        %208 = sbr.rel (%p206) target = $region16
      $region15: #{critic_forward.1} parent=11 // pred_region
        _
      $region16: #{critic_forward.1} parent=11 // pred_fallthru
        _
      // Predicated region
      $region17: #{critic_forward.1} parent=11 // pred_check
        %p209 = pneg %p81
      $region18: #{critic_forward.1} parent=11 // pred_check_branch
        %211 = sbr.rel (%p209) target = $region20
      $region19: #{critic_forward.1} parent=11 // pred_region
        _
      $region20: #{critic_forward.1} parent=11 // pred_fallthru
        _
      // Predicated region
      $region21: #{critic_forward.1} parent=11 // pred_check
        %p212 = pneg %p102
      $region22: #{critic_forward.1} parent=11 // pred_check_branch
        %214 = sbr.rel (%p212) target = $region24
      $region23: #{critic_forward.1} parent=11 // pred_region
        _
      $region24: #{critic_forward.1} parent=11 // pred_fallthru
        _
      // Predicated region
      $region25: #{critic_forward.1} parent=11 // pred_check
        %p215 = pneg %p123
      $region26: #{critic_forward.1} parent=11 // pred_check_branch
        %217 = sbr.rel (%p215) target = $region28
      $region27: #{critic_forward.1} parent=11 // pred_region
        _
      $region28: #{critic_forward.1} parent=11 // pred_fallthru
        _
      // Predicated region
      $region29: #{critic_forward.1} parent=11 // pred_check
        %p218 = pneg %p144
      $region30: #{critic_forward.1} parent=11 // pred_check_branch
        %220 = sbr.rel (%p218) target = $region32
      $region31: #{critic_forward.1} parent=11 // pred_region
        _
      $region32: #{critic_forward.1} parent=11 // pred_fallthru
        _
      // Predicated region
      $region33: #{critic_forward.1} parent=11 // pred_check
        %p221 = pneg %p165
      $region34: #{critic_forward.1} parent=11 // pred_check_branch
        %223 = sbr.rel (%p221) target = $region36
      $region35: #{critic_forward.1} parent=11 // pred_region
        _
      $region36: #{critic_forward.1} parent=11 // pred_fallthru
        _
    $region12: #{critic_forward.1} parent=5 // pred_fallthru
      _
    %p224 = scmp.lt.s32.totalorder %s13, 2
    // Predicated region
    $region37: #{critic_forward.1} parent=5 // pred_check
      %p225 = pneg %p224
    $region38: #{critic_forward.1} parent=5 // pred_check_branch
      %227 = sbr.rel (%p225) target = $region40
    $region39: #{critic_forward.1} parent=5 // pred_region
      // Predicated region
      $region41: #{critic_forward.1} parent=39 // pred_check
        %p228 = pneg %p33
      $region42: #{critic_forward.1} parent=39 // pred_check_branch
        %230 = sbr.rel (%p228) target = $region44
      $region43: #{critic_forward.1} parent=39 // pred_region
        %s231 = smul.u32 16, %s13
        %p232 = scmp.lt.s32.totalorder %s231, 31
        %s233 = scalar_select %p232, %s231, 31
        %s234 = smul.addr %s233, 4
        %s235 = scalar_lea.vmem %s0, %s234
        %s236 = smul.u32 16, %s13
      $region44: #{critic_forward.1} parent=39 // pred_fallthru
        _
    $region40: #{critic_forward.1} parent=5 // pred_fallthru
      _
    %p237 = scmp.le.s32.totalorder 1, %s13
    %p238 = scmp.lt.s32.totalorder %s13, 3
    %p239 = pnand %p237, %p238
    %p240 = pneg %p239
    // Predicated region
    $region45: #{critic_forward.1} parent=5 // pred_check
      _
    $region46: #{critic_forward.1} parent=5 // pred_check_branch
      %242 = sbr.rel (%p239) target = $region48
    $region47: #{critic_forward.1} parent=5 // pred_region
      %s243 = ssub.s32 %s13, 1
      %s244 = smul.u32 16, %s18
      %p245 = scmp.lt.s32.totalorder %s244, 31
      %s246 = scalar_select %p245, %s244, 31
      %s247 = smul.addr %s246, 4
      %s248 = scalar_lea.vmem %s0, %s247
      %p249 = pneg %p39
      %p250 = pneg %p36
      %p251 = pneg %p60
      %p252 = pneg %p57
      %p253 = pneg %p81
      %p254 = pneg %p78
      %p255 = pneg %p102
      %p256 = pneg %p99
      %p257 = pneg %p123
      %p258 = pneg %p120
      %p259 = pneg %p144
      %p260 = pneg %p141
      %p261 = pneg %p165
      %p262 = pneg %p162
      %p263 = pneg %p191
      %p264 = pneg %p188
      %s265 = smul.u32 16, %s18
      %p266 = scmp.lt.s32.totalorder %s265, 31
      %s267 = scalar_select %p266, %s265, 31
      %s268 = smul.addr %s267, 8
      %s269 = scalar_lea.vmem %s7, %s268
      %s270 = smul.u32 16, %s18
      %p271 = scmp.lt.s32.totalorder %s270, 31
      %s272 = scalar_select %p271, %s270, 31
      %s273 = smul.addr %s272, 4
      %s274 = scalar_lea.vmem %s0, %s273
      %s275 = smul.u32 16, %s18
      %s276 = smul.u32 16, %s18
      %p277 = scmp.lt.s32.totalorder %s276, 31
      %s278 = scalar_select %p277, %s276, 31
      %s279 = smul.addr %s278, 8
      %s280 = scalar_lea.vmem %s7, %s279
      %s281 = smul.u32 16, %s18
      %v283 = vld [vmem:[%s274] sm:$0xf]
      %v284 = vld [vmem:[%s274 + $0x4] sm:$0xf]
      %v285 = vld [vmem:[%s274 + $0x8] sm:$0xf]
      %v286 = vld [vmem:[%s274 + $0xc] sm:$0xf]
      %v287 = vld [vmem:[%s274 + $0x10] sm:$0xf]
      %v288 = vld [vmem:[%s274 + $0x14] sm:$0xf]
      %v289 = vld [vmem:[%s274 + $0x18] sm:$0xf]
      %v290 = vld [vmem:[%s274 + $0x1c] sm:$0xf]
      %v291 = vld [vmem:[%s274 + $0x20] sm:$0xf]
      %v292 = vld [vmem:[%s274 + $0x24] sm:$0xf]
      %v293 = vld [vmem:[%s274 + $0x28] sm:$0xf]
      %v294 = vld [vmem:[%s274 + $0x2c] sm:$0xf]
      %v295 = vld [vmem:[%s274 + $0x30] sm:$0xf]
      %v296 = vld [vmem:[%s274 + $0x34] sm:$0xf]
      %v297 = vld [vmem:[%s274 + $0x38] sm:$0xf]
      %v298 = vld [vmem:[%s274 + $0x3c] sm:$0xf]
      %v299 = vld [vmem:[%s1] sm:$0xf]
      %v300 = vld [vmem:[%s1 + $0x4] sm:$0xf]
      %v301 = vld [vmem:[%s1 + $0x8] sm:$0xf]
      %v302 = vld [vmem:[%s1 + $0xc] sm:$0xf]
      %v303 = vld [vmem:[%s2] sm:$0x1]
      %v305 = vlaneseq
      %v306 = vshrl.u32 %v305, 7
      %v307 = vsub.s32 0, %v306
      %v308 = vrot.slane %v303, %v307
      %v326 = vunpack.c.l.b16 %v283
      %v327 = vunpack.c.l.b16 %v284
      %v328 = vunpack.c.l.b16 %v285
      %v329 = vunpack.c.l.b16 %v286
      %v330 = vunpack.c.l.b16 %v287
      %v331 = vunpack.c.l.b16 %v288
      %v332 = vunpack.c.l.b16 %v289
      %v333 = vunpack.c.l.b16 %v290
      %v334 = vunpack.c.l.b16 %v291
      %v335 = vunpack.c.l.b16 %v292
      %v336 = vunpack.c.l.b16 %v293
      %v337 = vunpack.c.l.b16 %v294
      %v338 = vunpack.c.l.b16 %v295
      %v339 = vunpack.c.l.b16 %v296
      %v340 = vunpack.c.l.b16 %v297
      %v341 = vunpack.c.l.b16 %v298
      %v342 = vpack.c.b16 %v327, %v326
      %v343 = vpack.c.b16 %v329, %v328
      %v344 = vpack.c.b16 %v331, %v330
      %v345 = vpack.c.b16 %v333, %v332
      %v346 = vpack.c.b16 %v335, %v334
      %v347 = vpack.c.b16 %v337, %v336
      %v348 = vpack.c.b16 %v339, %v338
      %v349 = vpack.c.b16 %v341, %v340
      %v354 = vunpack.c.l.b16 %v299
      %v355 = vunpack.c.l.b16 %v300
      %v356 = vunpack.c.l.b16 %v301
      %v357 = vunpack.c.l.b16 %v302
      %v358 = vpack.c.b16 %v355, %v354
      %v359 = vpack.c.b16 %v357, %v356
      %vm362 = vcmask 261120
      %v364 = vsel %vm362, %v342, 0
      %v367 = vsel %vm362, %v343, 0
      %v370 = vsel %vm362, %v344, 0
      %v373 = vsel %vm362, %v345, 0
      %v376 = vsel %vm362, %v346, 0
      %v379 = vsel %vm362, %v347, 0
      %v382 = vsel %vm362, %v348, 0
      %v385 = vsel %vm362, %v349, 0
      %387 = vmatprep.subr.bf16.mxu0 0
      %388 = vmatpush1.bf16.msra.mxu0 %v358
      %389 = vmatprep.subr.bf16.mxu0 0
      %390 = vmatpush1.bf16.msra.mxu0 %v359
      %391 = vmatprep.subr.bf16.mxu0 0
      %392 = vmatpush1.bf16.msra.mxu0 0
      %393 = vmatprep.subr.bf16.mxu0 0
      %394 = vmatpush1.bf16.msra.mxu0 0
      %395 = vmatprep.subr.bf16.mxu0 0
      %396 = vmatpush1.bf16.msra.mxu0 0
      %397 = vmatprep.subr.bf16.mxu0 0
      %398 = vmatpush1.bf16.msra.mxu0 0
      %399 = vmatprep.subr.bf16.mxu0 0
      %400 = vmatpush1.bf16.msra.mxu0 0
      %401 = vmatprep.subr.bf16.mxu0 0
      %402 = vmatpush1.bf16.msra.mxu0 0
      %403 = vmatprep.subr.bf16.mxu0 0
      %404 = vmatpush1.bf16.msra.mxu0 0
      %405 = vmatprep.subr.bf16.mxu0 0
      %406 = vmatpush1.bf16.msra.mxu0 0
      %407 = vmatprep.subr.bf16.mxu0 0
      %408 = vmatpush1.bf16.msra.mxu0 0
      %409 = vmatprep.subr.bf16.mxu0 0
      %410 = vmatpush1.bf16.msra.mxu0 0
      %411 = vmatprep.subr.bf16.mxu0 0
      %412 = vmatpush1.bf16.msra.mxu0 0
      %413 = vmatprep.subr.bf16.mxu0 0
      %414 = vmatpush1.bf16.msra.mxu0 0
      %415 = vmatprep.subr.bf16.mxu0 0
      %416 = vmatpush1.bf16.msra.mxu0 0
      %417 = vmatprep.subr.bf16.mxu0 0
      %418 = vmatpush1.bf16.msra.mxu0 0
      %419 = vmatprep.mubr.bf16.mxu0 0
      %420 = vmatmul.mubr.bf16.gmra.mrb[0].mxu0 %v364
      %v421 = vpop.f32.mrb[0].mxu0
      %v422 = vadd.f32 %v308, %v421
      %v423 = vpop.f32.mrb[0].mxu0
      %v424 = vpop.f32.mrb[0].mxu0
      %v425 = vadd.f32 %v308, %v424
      %v426 = vpop.f32.mrb[0].mxu0
      %427 = vmatprep.mubr.bf16.mxu0 0
      %428 = vmatmul.mubr.bf16.gmra.mrb[0].mxu0 %v367
      %v429 = vpop.f32.mrb[0].mxu0
      %v430 = vadd.f32 %v308, %v429
      %v431 = vpop.f32.mrb[0].mxu0
      %v432 = vpop.f32.mrb[0].mxu0
      %v433 = vadd.f32 %v308, %v432
      %v434 = vpop.f32.mrb[0].mxu0
      %435 = vmatprep.mubr.bf16.mxu0 0
      %436 = vmatmul.mubr.bf16.gmra.mrb[0].mxu0 %v370
      %v437 = vpop.f32.mrb[0].mxu0
      %v438 = vadd.f32 %v308, %v437
      %v439 = vpop.f32.mrb[0].mxu0
      %v440 = vpop.f32.mrb[0].mxu0
      %v441 = vadd.f32 %v308, %v440
      %v442 = vpop.f32.mrb[0].mxu0
      %443 = vmatprep.mubr.bf16.mxu0 0
      %444 = vmatmul.mubr.bf16.gmra.mrb[0].mxu0 %v373
      %v445 = vpop.f32.mrb[0].mxu0
      %v446 = vadd.f32 %v308, %v445
      %v447 = vpop.f32.mrb[0].mxu0
      %v448 = vpop.f32.mrb[0].mxu0
      %v449 = vadd.f32 %v308, %v448
      %v450 = vpop.f32.mrb[0].mxu0
      %451 = vmatprep.mubr.bf16.mxu0 0
      %452 = vmatmul.mubr.bf16.gmra.mrb[0].mxu0 %v376
      %v453 = vpop.f32.mrb[0].mxu0
      %v454 = vadd.f32 %v308, %v453
      %v455 = vpop.f32.mrb[0].mxu0
      %v456 = vpop.f32.mrb[0].mxu0
      %v457 = vadd.f32 %v308, %v456
      %v458 = vpop.f32.mrb[0].mxu0
      %459 = vmatprep.mubr.bf16.mxu0 0
      %460 = vmatmul.mubr.bf16.gmra.mrb[0].mxu0 %v379
      %v461 = vpop.f32.mrb[0].mxu0
      %v462 = vadd.f32 %v308, %v461
      %v463 = vpop.f32.mrb[0].mxu0
      %v464 = vpop.f32.mrb[0].mxu0
      %v465 = vadd.f32 %v308, %v464
      %v466 = vpop.f32.mrb[0].mxu0
      %467 = vmatprep.mubr.bf16.mxu0 0
      %468 = vmatmul.mubr.bf16.gmra.mrb[0].mxu0 %v382
      %v469 = vpop.f32.mrb[0].mxu0
      %v470 = vadd.f32 %v308, %v469
      %v471 = vpop.f32.mrb[0].mxu0
      %v472 = vpop.f32.mrb[0].mxu0
      %v473 = vadd.f32 %v308, %v472
      %v474 = vpop.f32.mrb[0].mxu0
      %475 = vmatprep.mubr.bf16.mxu0 0
      %476 = vmatmul.mubr.bf16.gmra.mrb[0].mxu0 %v385
      %v477 = vpop.f32.mrb[0].mxu0
      %v478 = vadd.f32 %v308, %v477
      %v479 = vpop.f32.mrb[0].mxu0
      %v480 = vpop.f32.mrb[0].mxu0
      %v481 = vadd.f32 %v308, %v480
      %v482 = vpop.f32.mrb[0].mxu0
      %483 = vdwg.mxu0
      %v484 = vmax.f32 %v422, 0.0
      %v485 = vmax.f32 %v425, 0.0
      %v486 = vmax.f32 %v430, 0.0
      %v487 = vmax.f32 %v433, 0.0
      %v488 = vmax.f32 %v438, 0.0
      %v489 = vmax.f32 %v441, 0.0
      %v490 = vmax.f32 %v446, 0.0
      %v491 = vmax.f32 %v449, 0.0
      %v492 = vmax.f32 %v454, 0.0
      %v493 = vmax.f32 %v457, 0.0
      %v494 = vmax.f32 %v462, 0.0
      %v495 = vmax.f32 %v465, 0.0
      %v496 = vmax.f32 %v470, 0.0
      %v497 = vmax.f32 %v473, 0.0
      %v498 = vmax.f32 %v478, 0.0
      %v499 = vmax.f32 %v481, 0.0
      %v500 = vpack.c.bf16 %v485, %v484
      %v501 = vpack.c.bf16 %v487, %v486
      %v502 = vpack.c.bf16 %v489, %v488
      %v503 = vpack.c.bf16 %v491, %v490
      %v504 = vpack.c.bf16 %v493, %v492
      %v505 = vpack.c.bf16 %v495, %v494
      %v506 = vpack.c.bf16 %v497, %v496
      %v507 = vpack.c.bf16 %v499, %v498
      %v508 = vld [vmem:[%s3] sm:$0xf]
      %v509 = vld [vmem:[%s3 + $0x4] sm:$0xf]
      %v510 = vld [vmem:[%s3 + $0x8] sm:$0xf]
      %v511 = vld [vmem:[%s3 + $0xc] sm:$0xf]
      %v512 = vld [vmem:[%s3 + $0x10] sm:$0xf]
      %v513 = vld [vmem:[%s3 + $0x14] sm:$0xf]
      %v514 = vld [vmem:[%s3 + $0x18] sm:$0xf]
      %v515 = vld [vmem:[%s3 + $0x1c] sm:$0xf]
      %v516 = vld [vmem:[%s3 + $0x20] sm:$0xf]
      %v517 = vld [vmem:[%s3 + $0x24] sm:$0xf]
      %v518 = vld [vmem:[%s3 + $0x28] sm:$0xf]
      %v519 = vld [vmem:[%s3 + $0x2c] sm:$0xf]
      %v520 = vld [vmem:[%s3 + $0x30] sm:$0xf]
      %v521 = vld [vmem:[%s3 + $0x34] sm:$0xf]
      %v522 = vld [vmem:[%s3 + $0x38] sm:$0xf]
      %v523 = vld [vmem:[%s3 + $0x3c] sm:$0xf]
      %v524 = vld [vmem:[%s4] sm:$0x1]
      %v526 = vlaneseq
      %v527 = vshrl.u32 %v526, 7
      %v528 = vsub.s32 0, %v527
      %v529 = vrot.slane %v524, %v528
      %v547 = vunpack.c.l.b16 %v508
      %v548 = vunpack.c.l.b16 %v509
      %v549 = vunpack.c.l.b16 %v510
      %v550 = vunpack.c.l.b16 %v511
      %v551 = vunpack.c.l.b16 %v512
      %v552 = vunpack.c.l.b16 %v513
      %v553 = vunpack.c.l.b16 %v514
      %v554 = vunpack.c.l.b16 %v515
      %v555 = vunpack.c.l.b16 %v516
      %v556 = vunpack.c.l.b16 %v517
      %v557 = vunpack.c.l.b16 %v518
      %v558 = vunpack.c.l.b16 %v519
      %v559 = vunpack.c.l.b16 %v520
      %v560 = vunpack.c.l.b16 %v521
      %v561 = vunpack.c.l.b16 %v522
      %v562 = vunpack.c.l.b16 %v523
      %v563 = vpack.c.b16 %v548, %v547
      %v564 = vpack.c.b16 %v550, %v549
      %v565 = vpack.c.b16 %v552, %v551
      %v566 = vpack.c.b16 %v554, %v553
      %v567 = vpack.c.b16 %v556, %v555
      %v568 = vpack.c.b16 %v558, %v557
      %v569 = vpack.c.b16 %v560, %v559
      %v570 = vpack.c.b16 %v562, %v561
      %579 = vmatprep.subr.bf16.mxu0 0
      %580 = vmatpush1.bf16.msra.mxu0 %v563
      %581 = vmatprep.subr.bf16.mxu0 0
      %582 = vmatpush1.bf16.msra.mxu0 %v564
      %583 = vmatprep.subr.bf16.mxu0 0
      %584 = vmatpush1.bf16.msra.mxu0 %v565
      %585 = vmatprep.subr.bf16.mxu0 0
      %586 = vmatpush1.bf16.msra.mxu0 %v566
      %587 = vmatprep.subr.bf16.mxu0 0
      %588 = vmatpush1.bf16.msra.mxu0 %v567
      %589 = vmatprep.subr.bf16.mxu0 0
      %590 = vmatpush1.bf16.msra.mxu0 %v568
      %591 = vmatprep.subr.bf16.mxu0 0
      %592 = vmatpush1.bf16.msra.mxu0 %v569
      %593 = vmatprep.subr.bf16.mxu0 0
      %594 = vmatpush1.bf16.msra.mxu0 %v570
      %595 = vmatprep.subr.bf16.mxu0 0
      %596 = vmatpush1.bf16.msra.mxu0 0
      %597 = vmatprep.subr.bf16.mxu0 0
      %598 = vmatpush1.bf16.msra.mxu0 0
      %599 = vmatprep.subr.bf16.mxu0 0
      %600 = vmatpush1.bf16.msra.mxu0 0
      %601 = vmatprep.subr.bf16.mxu0 0
      %602 = vmatpush1.bf16.msra.mxu0 0
      %603 = vmatprep.subr.bf16.mxu0 0
      %604 = vmatpush1.bf16.msra.mxu0 0
      %605 = vmatprep.subr.bf16.mxu0 0
      %606 = vmatpush1.bf16.msra.mxu0 0
      %607 = vmatprep.subr.bf16.mxu0 0
      %608 = vmatpush1.bf16.msra.mxu0 0
      %609 = vmatprep.subr.bf16.mxu0 0
      %610 = vmatpush1.bf16.msra.mxu0 0
      %611 = vmatprep.mubr.bf16.mxu0 0
      %612 = vmatmul.mubr.bf16.gmra.mrb[0].mxu0 %v500
      %v613 = vpop.f32.mrb[0].mxu0
      %v614 = vadd.f32 %v529, %v613
      %v615 = vpop.f32.mrb[0].mxu0
      %v616 = vpop.f32.mrb[0].mxu0
      %v617 = vadd.f32 %v529, %v616
      %v618 = vpop.f32.mrb[0].mxu0
      %619 = vmatprep.mubr.bf16.mxu0 0
      %620 = vmatmul.mubr.bf16.gmra.mrb[0].mxu0 %v501
      %v621 = vpop.f32.mrb[0].mxu0
      %v622 = vadd.f32 %v529, %v621
      %v623 = vpop.f32.mrb[0].mxu0
      %v624 = vpop.f32.mrb[0].mxu0
      %v625 = vadd.f32 %v529, %v624
      %v626 = vpop.f32.mrb[0].mxu0
      %627 = vmatprep.mubr.bf16.mxu0 0
      %628 = vmatmul.mubr.bf16.gmra.mrb[0].mxu0 %v502
      %v629 = vpop.f32.mrb[0].mxu0
      %v630 = vadd.f32 %v529, %v629
      %v631 = vpop.f32.mrb[0].mxu0
      %v632 = vpop.f32.mrb[0].mxu0
      %v633 = vadd.f32 %v529, %v632
      %v634 = vpop.f32.mrb[0].mxu0
      %635 = vmatprep.mubr.bf16.mxu0 0
      %636 = vmatmul.mubr.bf16.gmra.mrb[0].mxu0 %v503
      %v637 = vpop.f32.mrb[0].mxu0
      %v638 = vadd.f32 %v529, %v637
      %v639 = vpop.f32.mrb[0].mxu0
      %v640 = vpop.f32.mrb[0].mxu0
      %v641 = vadd.f32 %v529, %v640
      %v642 = vpop.f32.mrb[0].mxu0
      %643 = vmatprep.mubr.bf16.mxu0 0
      %644 = vmatmul.mubr.bf16.gmra.mrb[0].mxu0 %v504
      %v645 = vpop.f32.mrb[0].mxu0
      %v646 = vadd.f32 %v529, %v645
      %v647 = vpop.f32.mrb[0].mxu0
      %v648 = vpop.f32.mrb[0].mxu0
      %v649 = vadd.f32 %v529, %v648
      %v650 = vpop.f32.mrb[0].mxu0
      %651 = vmatprep.mubr.bf16.mxu0 0
      %652 = vmatmul.mubr.bf16.gmra.mrb[0].mxu0 %v505
      %v653 = vpop.f32.mrb[0].mxu0
      %v654 = vadd.f32 %v529, %v653
      %v655 = vpop.f32.mrb[0].mxu0
      %v656 = vpop.f32.mrb[0].mxu0
      %v657 = vadd.f32 %v529, %v656
      %v658 = vpop.f32.mrb[0].mxu0
      %659 = vmatprep.mubr.bf16.mxu0 0
      %660 = vmatmul.mubr.bf16.gmra.mrb[0].mxu0 %v506
      %v661 = vpop.f32.mrb[0].mxu0
      %v662 = vadd.f32 %v529, %v661
      %v663 = vpop.f32.mrb[0].mxu0
      %v664 = vpop.f32.mrb[0].mxu0
      %v665 = vadd.f32 %v529, %v664
      %v666 = vpop.f32.mrb[0].mxu0
      %667 = vmatprep.mubr.bf16.mxu0 0
      %668 = vmatmul.mubr.bf16.gmra.mrb[0].mxu0 %v507
      %v669 = vpop.f32.mrb[0].mxu0
      %v670 = vadd.f32 %v529, %v669
      %v671 = vpop.f32.mrb[0].mxu0
      %v672 = vpop.f32.mrb[0].mxu0
      %v673 = vadd.f32 %v529, %v672
      %v674 = vpop.f32.mrb[0].mxu0
      %675 = vdwg.mxu0
      %v676 = vmax.f32 %v614, 0.0
      %v677 = vmax.f32 %v617, 0.0
      %v678 = vmax.f32 %v622, 0.0
      %v679 = vmax.f32 %v625, 0.0
      %v680 = vmax.f32 %v630, 0.0
      %v681 = vmax.f32 %v633, 0.0
      %v682 = vmax.f32 %v638, 0.0
      %v683 = vmax.f32 %v641, 0.0
      %v684 = vmax.f32 %v646, 0.0
      %v685 = vmax.f32 %v649, 0.0
      %v686 = vmax.f32 %v654, 0.0
      %v687 = vmax.f32 %v657, 0.0
      %v688 = vmax.f32 %v662, 0.0
      %v689 = vmax.f32 %v665, 0.0
      %v690 = vmax.f32 %v670, 0.0
      %v691 = vmax.f32 %v673, 0.0
      %v692 = vpack.c.bf16 %v677, %v676
      %v693 = vpack.c.bf16 %v679, %v678
      %v694 = vpack.c.bf16 %v681, %v680
      %v695 = vpack.c.bf16 %v683, %v682
      %v696 = vpack.c.bf16 %v685, %v684
      %v697 = vpack.c.bf16 %v687, %v686
      %v698 = vpack.c.bf16 %v689, %v688
      %v699 = vpack.c.bf16 %v691, %v690
      %v700 = vld [vmem:[%s5] sm:$0xf]
      %v701 = vld [vmem:[%s5 + $0x4] sm:$0xf]
      %v702 = vld [vmem:[%s5 + $0x8] sm:$0xf]
      %v703 = vld [vmem:[%s5 + $0xc] sm:$0xf]
      %v704 = vld [vmem:[%s5 + $0x10] sm:$0xf]
      %v705 = vld [vmem:[%s5 + $0x14] sm:$0xf]
      %v706 = vld [vmem:[%s5 + $0x18] sm:$0xf]
      %v707 = vld [vmem:[%s5 + $0x1c] sm:$0xf]
      %v708 = vld [vmem:[%s5 + $0x20] sm:$0xf]
      %v709 = vld [vmem:[%s5 + $0x24] sm:$0xf]
      %v710 = vld [vmem:[%s5 + $0x28] sm:$0xf]
      %v711 = vld [vmem:[%s5 + $0x2c] sm:$0xf]
      %v712 = vld [vmem:[%s5 + $0x30] sm:$0xf]
      %v713 = vld [vmem:[%s5 + $0x34] sm:$0xf]
      %v714 = vld [vmem:[%s5 + $0x38] sm:$0xf]
      %v715 = vld [vmem:[%s5 + $0x3c] sm:$0xf]
      %v716 = vld [vmem:[%s6] sm:$0x1]
      %v718 = vlaneseq
      %v719 = vshrl.u32 %v718, 7
      %v720 = vsub.s32 0, %v719
      %v721 = vrot.slane %v716, %v720
      %v739 = vunpack.c.l.b16 %v700
      %v740 = vunpack.c.l.b16 %v701
      %v741 = vunpack.c.l.b16 %v702
      %v742 = vunpack.c.l.b16 %v703
      %v743 = vunpack.c.l.b16 %v704
      %v744 = vunpack.c.l.b16 %v705
      %v745 = vunpack.c.l.b16 %v706
      %v746 = vunpack.c.l.b16 %v707
      %v747 = vunpack.c.l.b16 %v708
      %v748 = vunpack.c.l.b16 %v709
      %v749 = vunpack.c.l.b16 %v710
      %v750 = vunpack.c.l.b16 %v711
      %v751 = vunpack.c.l.b16 %v712
      %v752 = vunpack.c.l.b16 %v713
      %v753 = vunpack.c.l.b16 %v714
      %v754 = vunpack.c.l.b16 %v715
      %v755 = vpack.c.b16 %v740, %v739
      %v756 = vpack.c.b16 %v742, %v741
      %v757 = vpack.c.b16 %v744, %v743
      %v758 = vpack.c.b16 %v746, %v745
      %v759 = vpack.c.b16 %v748, %v747
      %v760 = vpack.c.b16 %v750, %v749
      %v761 = vpack.c.b16 %v752, %v751
      %v762 = vpack.c.b16 %v754, %v753
      %771 = vmatprep.subr.bf16.mxu0 0
      %772 = vmatpush1.bf16.msra.mxu0 %v755
      %773 = vmatprep.subr.bf16.mxu0 0
      %774 = vmatpush1.bf16.msra.mxu0 %v756
      %775 = vmatprep.subr.bf16.mxu0 0
      %776 = vmatpush1.bf16.msra.mxu0 %v757
      %777 = vmatprep.subr.bf16.mxu0 0
      %778 = vmatpush1.bf16.msra.mxu0 %v758
      %779 = vmatprep.subr.bf16.mxu0 0
      %780 = vmatpush1.bf16.msra.mxu0 %v759
      %781 = vmatprep.subr.bf16.mxu0 0
      %782 = vmatpush1.bf16.msra.mxu0 %v760
      %783 = vmatprep.subr.bf16.mxu0 0
      %784 = vmatpush1.bf16.msra.mxu0 %v761
      %785 = vmatprep.subr.bf16.mxu0 0
      %786 = vmatpush1.bf16.msra.mxu0 %v762
      %787 = vmatprep.subr.bf16.mxu0 0
      %788 = vmatpush1.bf16.msra.mxu0 0
      %789 = vmatprep.subr.bf16.mxu0 0
      %790 = vmatpush1.bf16.msra.mxu0 0
      %791 = vmatprep.subr.bf16.mxu0 0
      %792 = vmatpush1.bf16.msra.mxu0 0
      %793 = vmatprep.subr.bf16.mxu0 0
      %794 = vmatpush1.bf16.msra.mxu0 0
      %795 = vmatprep.subr.bf16.mxu0 0
      %796 = vmatpush1.bf16.msra.mxu0 0
      %797 = vmatprep.subr.bf16.mxu0 0
      %798 = vmatpush1.bf16.msra.mxu0 0
      %799 = vmatprep.subr.bf16.mxu0 0
      %800 = vmatpush1.bf16.msra.mxu0 0
      %801 = vmatprep.subr.bf16.mxu0 0
      %802 = vmatpush1.bf16.msra.mxu0 0
      %803 = vmatprep.mubr.bf16.mxu0 0
      %804 = vmatmul.mubr.bf16.gmra.mrb[0].mxu0 %v692
      %v805 = vpop.f32.mrb[0].mxu0
      %v806 = vadd.f32 %v721, %v805
      %v807 = vpop.f32.mrb[0].mxu0
      %v808 = vpop.f32.mrb[0].mxu0
      %v809 = vadd.f32 %v721, %v808
      %v810 = vpop.f32.mrb[0].mxu0
      %811 = vmatprep.mubr.bf16.mxu0 0
      %812 = vmatmul.mubr.bf16.gmra.mrb[0].mxu0 %v693
      %v813 = vpop.f32.mrb[0].mxu0
      %v814 = vadd.f32 %v721, %v813
      %v815 = vpop.f32.mrb[0].mxu0
      %v816 = vpop.f32.mrb[0].mxu0
      %v817 = vadd.f32 %v721, %v816
      %v818 = vpop.f32.mrb[0].mxu0
      %819 = vmatprep.mubr.bf16.mxu0 0
      %820 = vmatmul.mubr.bf16.gmra.mrb[0].mxu0 %v694
      %v821 = vpop.f32.mrb[0].mxu0
      %v822 = vadd.f32 %v721, %v821
      %v823 = vpop.f32.mrb[0].mxu0
      %v824 = vpop.f32.mrb[0].mxu0
      %v825 = vadd.f32 %v721, %v824
      %v826 = vpop.f32.mrb[0].mxu0
      %827 = vmatprep.mubr.bf16.mxu0 0
      %828 = vmatmul.mubr.bf16.gmra.mrb[0].mxu0 %v695
      %v829 = vpop.f32.mrb[0].mxu0
      %v830 = vadd.f32 %v721, %v829
      %v831 = vpop.f32.mrb[0].mxu0
      %v832 = vpop.f32.mrb[0].mxu0
      %v833 = vadd.f32 %v721, %v832
      %v834 = vpop.f32.mrb[0].mxu0
      %835 = vmatprep.mubr.bf16.mxu0 0
      %836 = vmatmul.mubr.bf16.gmra.mrb[0].mxu0 %v696
      %v837 = vpop.f32.mrb[0].mxu0
      %v838 = vadd.f32 %v721, %v837
      %v839 = vpop.f32.mrb[0].mxu0
      %v840 = vpop.f32.mrb[0].mxu0
      %v841 = vadd.f32 %v721, %v840
      %v842 = vpop.f32.mrb[0].mxu0
      %843 = vmatprep.mubr.bf16.mxu0 0
      %844 = vmatmul.mubr.bf16.gmra.mrb[0].mxu0 %v697
      %v845 = vpop.f32.mrb[0].mxu0
      %v846 = vadd.f32 %v721, %v845
      %v847 = vpop.f32.mrb[0].mxu0
      %v848 = vpop.f32.mrb[0].mxu0
      %v849 = vadd.f32 %v721, %v848
      %v850 = vpop.f32.mrb[0].mxu0
      %851 = vmatprep.mubr.bf16.mxu0 0
      %852 = vmatmul.mubr.bf16.gmra.mrb[0].mxu0 %v698
      %v853 = vpop.f32.mrb[0].mxu0
      %v854 = vadd.f32 %v721, %v853
      %v855 = vpop.f32.mrb[0].mxu0
      %v856 = vpop.f32.mrb[0].mxu0
      %v857 = vadd.f32 %v721, %v856
      %v858 = vpop.f32.mrb[0].mxu0
      %859 = vmatprep.mubr.bf16.mxu0 0
      %860 = vmatmul.mubr.bf16.gmra.mrb[0].mxu0 %v699
      %v861 = vpop.f32.mrb[0].mxu0
      %v862 = vadd.f32 %v721, %v861
      %v863 = vpop.f32.mrb[0].mxu0
      %v864 = vpop.f32.mrb[0].mxu0
      %v865 = vadd.f32 %v721, %v864
      %v866 = vpop.f32.mrb[0].mxu0
      %867 = vdwg.mxu0
      %868 = vst [vmem:[%s280] sm:$0xff] %v806
      %869 = vst [vmem:[%s280 + $0x8] sm:$0xff] %v809
      %870 = vst [vmem:[%s280 + $0x10] sm:$0xff] %v814
      %871 = vst [vmem:[%s280 + $0x18] sm:$0xff] %v817
      %872 = vst [vmem:[%s280 + $0x20] sm:$0xff] %v822
      %873 = vst [vmem:[%s280 + $0x28] sm:$0xff] %v825
      %874 = vst [vmem:[%s280 + $0x30] sm:$0xff] %v830
      %875 = vst [vmem:[%s280 + $0x38] sm:$0xff] %v833
      %876 = vst [vmem:[%s280 + $0x40] sm:$0xff] %v838
      %877 = vst [vmem:[%s280 + $0x48] sm:$0xff] %v841
      %878 = vst [vmem:[%s280 + $0x50] sm:$0xff] %v846
      %879 = vst [vmem:[%s280 + $0x58] sm:$0xff] %v849
      %880 = vst [vmem:[%s280 + $0x60] sm:$0xff] %v854
      %881 = vst [vmem:[%s280 + $0x68] sm:$0xff] %v857
      %882 = vst [vmem:[%s280 + $0x70] sm:$0xff] %v862
      %883 = vst [vmem:[%s280 + $0x78] sm:$0xff] %v865
      %s884 = smul.u32 16, %s18
      %p885 = scmp.lt.s32.totalorder %s884, 31
      %s886 = scalar_select %p885, %s884, 31
      %s887 = smul.addr %s886, 8
      %s888 = scalar_lea.vmem %s7, %s887
      // Predicated region
      $region49: #{critic_forward.1} parent=47 // pred_check
        %p889 = pneg %p188
      $region50: #{critic_forward.1} parent=47 // pred_check_branch
        %891 = sbr.rel (%p889) target = $region52
      $region51: #{critic_forward.1} parent=47 // pred_region
        %s892 = smul.u32 16, %s18
      $region52: #{critic_forward.1} parent=47 // pred_fallthru
        _
    $region48: #{critic_forward.1} parent=5 // pred_fallthru
      _
    %p893 = scmp.le.s32.totalorder 2, %s13
    // Predicated region
    $region53: #{critic_forward.1} parent=5 // pred_check
      %p894 = pneg %p893
    $region54: #{critic_forward.1} parent=5 // pred_check_branch
      %896 = sbr.rel (%p894) target = $region56
    $region55: #{critic_forward.1} parent=5 // pred_region
      %s897 = ssub.s32 %s13, 2
      // Predicated region
      $region57: #{critic_forward.1} parent=55 // pred_check
        %p898 = pneg %p194
      $region58: #{critic_forward.1} parent=55 // pred_check_branch
        %900 = sbr.rel (%p898) target = $region60
      $region59: #{critic_forward.1} parent=55 // pred_region
        %s901 = smul.u32 16, %s19
        %p902 = scmp.lt.s32.totalorder %s901, 31
        %s903 = scalar_select %p902, %s901, 31
        %s904 = smul.addr %s903, 8
        %s905 = scalar_lea.vmem %s7, %s904
      $region60: #{critic_forward.1} parent=55 // pred_fallthru
        _
    $region56: #{critic_forward.1} parent=5 // pred_fallthru
      _
  $region6: #{critic_forward.1} parent=0 // loop_footer
    %s17 = sadd.s32 1, %s13
  $region7: #{critic_forward.1} parent=0 // loop_footer_branch
    %12 = sbr.rel target = $region3
  $region8: #{critic_forward.1} parent=0 // loop_exit
    _

</llo_original>
